<compile_context>
chip_gen: v6e
topology: v6e:2x2x1
jax: 0.10.0
libtpu: 0.0.40
codegen_flags: <defaults>
</compile_context>

<pallas_src>
import functools

import jax
import jax.numpy as jnp
from jax import lax
from jax.experimental import pallas as pl
from jax.experimental.pallas import tpu as pltpu


# ----------------------------------------------------------------------------- #
# Kernel: per-anchor self-excluded log-sum-exp over the contrast axis
# ----------------------------------------------------------------------------- #
def _supcon_lse_kernel(a_ref, c_ref, logz_ref, m_sc, l_sc, *,
                       n_cols, tile_m, tile_n, pad_cols):
    """One (row-block i, column-block j) step of the masked online LSE."""
    i = pl.program_id(0)
    j = pl.program_id(1)
    nj = pl.num_programs(1)

    @pl.when(j == 0)
    def _init():
        m_sc[...] = jnp.full(m_sc.shape, -jnp.inf, m_sc.dtype)
        l_sc[...] = jnp.zeros(l_sc.shape, l_sc.dtype)

    # logits tile:  (anchor * 1/temperature) . contrast^T  -- MXU, f32 accumulate.
    # dot_general contracts the last dims of both operands (no transpose / XLU work).
    s = lax.dot_general(a_ref[...], c_ref[...],
                        (((1,), (1,)), ((), ())),
                        preferred_element_type=jnp.float32)        # [TM, TN] f32

    row_lo = i * tile_m
    col_lo = j * tile_n
    # Does this tile contain any self-contrast (diagonal) element?
    has_diag = jnp.logical_and(row_lo < col_lo + tile_n, col_lo < row_lo + tile_m)
    if pad_cols:                                   # static: padding exists at all?
        needs_mask = jnp.logical_or(has_diag, j == nj - 1)
    else:
        needs_mask = has_diag

    # ---- fast path (vast majority of tiles): no iota / compare / select at all ----
    @pl.when(jnp.logical_not(needs_mask))
    def _fast():
        m_tile = jnp.max(s, axis=1, keepdims=True)
        m_new = jnp.maximum(m_sc[...], m_tile)
        e_sum = jnp.sum(jnp.exp(s - m_new), axis=1, keepdims=True)
        l_sc[...] = jnp.exp(m_sc[...] - m_new) * l_sc[...] + e_sum
        m_sc[...] = m_new

    # ---- masked path: diagonal-overlapping tiles and/or the padded last block ----
    @pl.when(needs_mask)
    def _masked():
        rows = row_lo + lax.broadcasted_iota(jnp.int32, s.shape, 0)
        cols = col_lo + lax.broadcasted_iota(jnp.int32, s.shape, 1)
        off_diag = rows != cols                      # logits_mask (self-contrast)
        if pad_cols:
            valid = cols < n_cols                    # drop padded contrast columns
            s_for_max = jnp.where(valid, s, -jnp.inf)   # torch max includes the diag
            lmask = jnp.logical_and(valid, off_diag)
        else:
            s_for_max = s
            lmask = off_diag
        m_tile = jnp.max(s_for_max, axis=1, keepdims=True)
        m_new = jnp.maximum(m_sc[...], m_tile)
        e = jnp.exp(jnp.where(lmask, s, -jnp.inf) - m_new)   # 0 on diag / padding
        l_sc[...] = (jnp.exp(m_sc[...] - m_new) * l_sc[...]
                     + jnp.sum(e, axis=1, keepdims=True))
        m_sc[...] = m_new

    @pl.when(j == nj - 1)
    def _finalize():
        # log Z_i = m_i + log(sum_{j != i} exp(s_ij - m_i) + 1e-8);  m_i is the true
        # row max over all real columns (diag included), matching torch (eps incl.).
        log_z = m_sc[...] + jnp.log(l_sc[...] + 1e-8)
        # Lane-dense write (unmasked vst); wrapper reads column 0.
        logz_ref[...] = jnp.broadcast_to(log_z, logz_ref.shape).astype(logz_ref.dtype)


# ----------------------------------------------------------------------------- #
# Wrapper
# ----------------------------------------------------------------------------- #
def _round_up(x, m):
    return (x + m - 1) // m * m


def _default_tile_cap():
    """Generation-aware tile cap: 512 on v6e/v7x, 256 on v5e and older/unknown."""
    try:
        kind = jax.devices()[0].device_kind.lower()
    except Exception:
        return 256
    if 'v6' in kind or 'v7' in kind:
        return 512     # ~0.35us/step pipeline overhead amortized; VMEM is ample
    return 256         # v5e: single vst slot / smaller scoped VMEM bite first


def _choose_tile(n, cap, at_least_two_blocks=False):
    """Pick a sublane-aligned tile for an axis of length n."""
    if n < 128:
        return _round_up(max(n, 8), 8)        # single small block
    limit = cap
    if at_least_two_blocks and n > 128:
        # >= 2 row blocks so the "parallel" axis can shard across 2 TCs (v7x/megacore).
        limit = min(limit, _round_up((n + 1) // 2, 128))
    return max(128, min(limit, _round_up(n, 128)))


def supcon_loss(features, labels=None, mask=None, *, temperature=0.07,
                contrast_mode='all', base_temperature=0.07,
                compute_dtype=None, max_tile=None):
    """Pallas implementation of SupConLoss.forward."""
    if features.ndim < 3:
        raise ValueError('`features` needs to be [bsz, n_views, ...],'
                         'at least 3 dimensions are required')
    if features.ndim > 3:
        # Flattening trailing dims commutes with F.normalize over dim=1.
        features = features.reshape(features.shape[0], features.shape[1], -1)
    features = features.astype(jnp.float32)
    B, V, D = features.shape

    if contrast_mode == 'one':
        anchor_count = 1
    elif contrast_mode == 'all':
        anchor_count = V
    else:
        raise ValueError('Unknown mode: {}'.format(contrast_mode))

    if labels is not None and mask is not None:
        raise ValueError('Cannot define both `labels` and `mask`')

    # F.normalize default: L2 over dim=1 (the n_views axis), eps=1e-12.
    norm = jnp.sqrt(jnp.sum(features * features, axis=1, keepdims=True))
    fn = features / jnp.maximum(norm, 1e-12)

    # contrast_feature = cat(unbind(features, dim=1), dim=0) -> view-major [V*B, D]
    contrast = jnp.transpose(fn, (1, 0, 2)).reshape(V * B, D)
    n_cols = V * B
    n_rows = anchor_count * B              # anchors are the first n_rows of contrast
    anchor = contrast[:n_rows]

    # -------- B x B positives mask (never tiled to N x N) --------
    if mask is not None:
        mask_bb = jnp.asarray(mask, jnp.float32)
    elif labels is not None:
        labels = jnp.asarray(labels).reshape(-1)
        if labels.shape[0] != B:
            raise ValueError('Num of labels does not match num of features')
        mask_bb = (labels[:, None] == labels[None, :]).astype(jnp.float32)
    else:
        mask_bb = jnp.eye(B, dtype=jnp.float32)          # SimCLR

    inv_t = jnp.float32(1.0 / float(temperature))

    # -------- hoisted positive-mask statistics (exact, f32) --------
    # tiled_mask[i,j] = mask_bb[i%B, j%B];  logits_mask only removes j == i, so
    #   pm_i  = V * rowsum(mask_bb)[i%B] - mask_bb[i%B, i%B]
    #   pms_i = (1/T) * ( a_i . W[i%B] - mask_bb[i%B,i%B] * ||a_i||^2 ),
    #   W[b]  = sum_b' mask_bb[b,b'] * (sum_v fn[b',v,:]).
    psum = jnp.sum(fn, axis=1)                                         # [B, D]
    W = jnp.matmul(mask_bb, psum, precision=lax.Precision.HIGHEST)     # [B, D]
    diag_bb = jnp.diagonal(mask_bb)                                    # [B]
    pm_b = V * jnp.sum(mask_bb, axis=1) - diag_bb                      # [B]
    pm = jnp.tile(pm_b, anchor_count)                                  # [M]
    W_rows = jnp.tile(W, (anchor_count, 1))                            # [M, D]
    diag_rows = jnp.tile(diag_bb, anchor_count)                        # [M]
    row_sq = jnp.sum(anchor * anchor, axis=1)                          # [M]
    pms = inv_t * (jnp.sum(anchor * W_rows, axis=1) - diag_rows * row_sq)   # [M]

    # -------- kernel launch: masked log-sum-exp over the contrast axis --------
    if compute_dtype is None:
        # MXU is not the limiter; keep f32 MXU inputs for modest D (tight accuracy),
        # fall back to bf16 only when the contraction dim gets large.
        compute_dtype = jnp.float32 if D <= 256 else jnp.bfloat16
    itemsize = jnp.dtype(compute_dtype).itemsize
    cap = int(max_tile) if max_tile is not None else _default_tile_cap()

    Dp = _round_up(D, 128)                 # lane-dense contraction dim
    tile_m = _choose_tile(n_rows, cap, at_least_two_blocks=True)
    tile_n = _choose_tile(n_cols, cap)

    # Keep the per-step working set well under VMEM even for very large D.
    # TODO(synk): tile the contraction (D) axis instead of shrinking M/N for huge D.
    while ((2 * (tile_m + tile_n) * Dp * itemsize + 8 * tile_m * tile_n * 4)
           > 40 * 1024 * 1024) and max(tile_m, tile_n) > 128:
        if tile_n >= tile_m:
            tile_n = max(128, tile_n // 2)
        else:
            tile_m = max(128, tile_m // 2)

    Mp = _round_up(n_rows, tile_m)
    Np = _round_up(n_cols, tile_n)
    pad_cols = Np - n_cols

    def _pad2(x, r, c):
        return jnp.pad(x, ((0, r - x.shape[0]), (0, c - x.shape[1])))

    anchor_p = _pad2(anchor * inv_t, Mp, Dp).astype(compute_dtype)   # fold 1/T in
    contrast_p = _pad2(contrast, Np, Dp).astype(compute_dtype)

    # VMEM request derived from actual need (double-buffered inputs + output +
    # scratch + headroom for f32 intermediates), not a blanket 48 MiB.
    vmem_need = (2 * (tile_m + tile_n) * Dp * itemsize
                 + 4 * tile_m * 128 * 4
                 + 8 * tile_m * tile_n * 4)
    vmem_limit = int(min(max(vmem_need, 16 * 1024 * 1024), 100 * 1024 * 1024))

    kernel = functools.partial(_supcon_lse_kernel, n_cols=n_cols,
                               tile_m=tile_m, tile_n=tile_n, pad_cols=pad_cols)

    logz = pl.pallas_call(
        kernel,
        out_shape=jax.ShapeDtypeStruct((Mp, 128), jnp.float32),     # lane-dense
        grid=(Mp // tile_m, Np // tile_n),
        in_specs=[pl.BlockSpec((tile_m, Dp), lambda i, j: (i, 0)),
                  pl.BlockSpec((tile_n, Dp), lambda i, j: (j, 0))],
        out_specs=pl.BlockSpec((tile_m, 128), lambda i, j: (i, 0)),
        # NOTE: the two (tile_m,1) scratch buffers could be fused into one lane-dense
        # buffer (minor item in the review); kept separate for clarity.
        scratch_shapes=[pltpu.VMEM((tile_m, 1), jnp.float32),
                        pltpu.VMEM((tile_m, 1), jnp.float32)],
        compiler_params=pltpu.CompilerParams(
            dimension_semantics=("parallel", "arbitrary"),
            vmem_limit_bytes=vmem_limit,
        ),
    )(anchor_p, contrast_p)

    log_z = logz[:n_rows, 0]                       # drop padded rows / extra lanes
    # NOTE: anchors with zero positives give 0/0 = NaN, exactly like the PyTorch module.
    mean_log_prob_pos = (pms - pm * log_z) / pm
    loss_rows = -(float(temperature) / float(base_temperature)) * mean_log_prob_pos
    # loss.view(anchor_count, batch_size).mean() == mean over the n_rows anchors.
    return jnp.mean(loss_rows)


# ----------------------------------------------------------------------------- #
# Pure-JAX reference mirroring the PyTorch module
# ----------------------------------------------------------------------------- #
def _supcon_ref(features, mask_bb, temperature=0.07, base_temperature=0.07,
                contrast_mode='all'):
    B, V, D = features.shape
    norm = jnp.sqrt(jnp.sum(features * features, axis=1, keepdims=True))
    fn = features / jnp.maximum(norm, 1e-12)
    contrast = jnp.transpose(fn, (1, 0, 2)).reshape(V * B, D)
    anchor_count = V if contrast_mode == 'all' else 1
    M = anchor_count * B
    N = V * B
    anchor = contrast[:M]
    logits = jnp.matmul(anchor, contrast.T,
                        precision=lax.Precision.HIGHEST) / temperature
    logits = logits - jnp.max(logits, axis=1, keepdims=True)
    logits_mask = (1.0 - jnp.eye(N, dtype=jnp.float32))[:M]
    m = jnp.tile(mask_bb, (anchor_count, V)) * logits_mask
    exp_l = jnp.exp(logits) * logits_mask
    log_prob = logits - jnp.log(jnp.sum(exp_l, axis=1, keepdims=True) + 1e-8)
    mlpp = jnp.sum(m * log_prob, axis=1) / jnp.sum(m, axis=1)
    return jnp.mean(-(temperature / base_temperature) * mlpp)


# ----------------------------------------------------------------------------- #
# Demo / self-check
# ----------------------------------------------------------------------------- #
if __name__ == "__main__":
    key = jax.random.PRNGKey(0)

    # ---- small problem: single tile ----
    bsz, n_views, dim = 8, 2, 32
    features = jax.random.normal(key, (bsz, n_views, dim), dtype=jnp.float32)
    labels = jnp.array([0, 0, 1, 1, 2, 2, 3, 3], dtype=jnp.int32)
    mask_bb = (labels[:, None] == labels[None, :]).astype(jnp.float32)

    # default path (auto f32 MXU inputs for small D): tight check vs reference.
    loss = jax.block_until_ready(supcon_loss(features, labels=labels))
    ref = jax.block_until_ready(_supcon_ref(features, mask_bb))
    assert jnp.allclose(loss, ref, rtol=2e-3, atol=2e-3), (loss, ref)

    # explicit bf16-MXU path: loose check (bf16 matmul inputs, f32 accumulate).
    loss_bf16 = jax.block_until_ready(
        supcon_loss(features, labels=labels, compute_dtype=jnp.bfloat16))
    assert jnp.allclose(loss_bf16, ref, rtol=5e-2, atol=1e-1), (loss_bf16, ref)

    # unsupervised (SimCLR) path.
    loss_simclr = jax.block_until_ready(supcon_loss(features))
    ref_simclr = jax.block_until_ready(
        _supcon_ref(features, jnp.eye(bsz, dtype=jnp.float32)))
    assert jnp.allclose(loss_simclr, ref_simclr, rtol=2e-3, atol=2e-3)

    # explicit-mask path (no mask stream needed any more: hoisted statistics).
    loss_mask = jax.block_until_ready(supcon_loss(features, mask=mask_bb))
    assert jnp.allclose(loss_mask, ref, rtol=2e-3, atol=2e-3), (loss_mask, ref)

    # contrast_mode='one' path (anchors = view-0 only).
    loss_one = jax.block_until_ready(
        supcon_loss(features, labels=labels, contrast_mode='one'))
    ref_one = jax.block_until_ready(_supcon_ref(features, mask_bb, contrast_mode='one'))
    assert jnp.allclose(loss_one, ref_one, rtol=2e-3, atol=2e-3), (loss_one, ref_one)

    # ---- medium problem: multi-block online LSE, column padding, and a mix of
    #      fast (mask-free) and masked (diag / padded) tiles (max_tile=128 -> 3x3 grid).
    bsz2 = 188
    feats2 = jax.random.normal(jax.random.PRNGKey(1), (bsz2, n_views, dim),
                               dtype=jnp.float32)
    labels2 = (jnp.arange(bsz2) % 10).astype(jnp.int32)
    mask_bb2 = (labels2[:, None] == labels2[None, :]).astype(jnp.float32)
    ref2 = jax.block_until_ready(_supcon_ref(feats2, mask_bb2))

    loss2 = jax.block_until_ready(supcon_loss(feats2, labels=labels2, max_tile=128))
    assert jnp.allclose(loss2, ref2, rtol=2e-3, atol=2e-3), (loss2, ref2)

    # same problem with the generation-aware default tiles.
    loss3 = jax.block_until_ready(supcon_loss(feats2, labels=labels2))
    assert jnp.allclose(loss3, ref2, rtol=2e-3, atol=2e-3), (loss3, ref2)

    print("KERNEL_OK")
</pallas_src>

<mosaic_0001>
module attributes {stable_mosaic.version = 11 : i64} {
  func.func @_supcon_lse_kernel(%arg0: i32, %arg1: i32, %arg2: memref<16x128xf32, #tpu.memory_space<vmem>>, %arg3: memref<16x128xf32, #tpu.memory_space<vmem>>, %arg4: memref<16x128xf32, #tpu.memory_space<vmem>>, %arg5: memref<16x1xf32, #tpu.memory_space<vmem>>, %arg6: memref<16x1xf32, #tpu.memory_space<vmem>>) attributes {dimension_semantics = [#tpu.dimension_semantics<parallel>, #tpu.dimension_semantics<arbitrary>], iteration_bounds = array<i64: 1, 1>, scalar_prefetch = 0 : i64, scratch_operands = 2 : i64, tpu.core_type = #tpu.core_type<tc>, window_params = [{transform_indices = @transform_0, window_bounds = array<i64: 16, 128>}, {transform_indices = @transform_1, window_bounds = array<i64: 16, 128>}, {transform_indices = @transform_2, window_bounds = array<i64: 16, 128>}]} {
    %c0_i32 = arith.constant 0 : i32
    %0 = arith.cmpi eq, %arg1, %c0_i32 : i32
    %1 = arith.extui %0 : i1 to i32
    %c0_i32_0 = arith.constant 0 : i32
    %2 = arith.cmpi ne, %1, %c0_i32_0 : i32
    scf.if %2 {
      %cst_11 = arith.constant 0xFF800000 : f32
      %21 = vector.broadcast %cst_11 : f32 to vector<16x1xf32>
      %c0_12 = arith.constant 0 : index
      %c0_13 = arith.constant 0 : index
      %22 = vector.load %arg5[%c0_12, %c0_13] : memref<16x1xf32, #tpu.memory_space<vmem>>, vector<16x1xf32>
      tpu.vector_store %arg5[%c0_12, %c0_13], %21 {strides = array<i32>} : memref<16x1xf32, #tpu.memory_space<vmem>>, vector<16x1xf32>,
      %cst_14 = arith.constant 0.000000e+00 : f32
      %23 = vector.broadcast %cst_14 : f32 to vector<16x1xf32>
      %c0_15 = arith.constant 0 : index
      %c0_16 = arith.constant 0 : index
      %24 = vector.load %arg6[%c0_15, %c0_16] : memref<16x1xf32, #tpu.memory_space<vmem>>, vector<16x1xf32>
      tpu.vector_store %arg6[%c0_15, %c0_16], %23 {strides = array<i32>} : memref<16x1xf32, #tpu.memory_space<vmem>>, vector<16x1xf32>,
    } else {
    }
    %c0 = arith.constant 0 : index
    %c0_1 = arith.constant 0 : index
    %3 = vector.load %arg2[%c0, %c0_1] : memref<16x128xf32, #tpu.memory_space<vmem>>, vector<16x128xf32>
    %c0_2 = arith.constant 0 : index
    %c0_3 = arith.constant 0 : index
    %4 = vector.load %arg3[%c0_2, %c0_3] : memref<16x128xf32, #tpu.memory_space<vmem>>, vector<16x128xf32>
    %cst = arith.constant dense<0.000000e+00> : vector<16x16xf32>
    %5 = tpu.matmul %3, %4, %cst {dimension_numbers = #tpu.dot_dimension_numbers<[1], [1], [0], [0], [0, 0, 1, 0], [], []>} : vector<16x128xf32>, vector<16x128xf32>, vector<16x16xf32> -> vector<16x16xf32>
    %c16_i32 = arith.constant 16 : i32
    %6 = arith.muli %arg0, %c16_i32 : i32
    %c16_i32_4 = arith.constant 16 : i32
    %7 = arith.muli %arg1, %c16_i32_4 : i32
    %c16_i32_5 = arith.constant 16 : i32
    %8 = arith.addi %7, %c16_i32_5 : i32
    %9 = arith.cmpi slt, %6, %8 : i32
    %c16_i32_6 = arith.constant 16 : i32
    %10 = arith.addi %6, %c16_i32_6 : i32
    %11 = arith.cmpi slt, %7, %10 : i32
    %12 = arith.andi %9, %11 : i1
    %true = arith.constant true
    %13 = arith.xori %12, %true : i1
    %14 = arith.extui %13 : i1 to i32
    %c0_i32_7 = arith.constant 0 : i32
    %15 = arith.cmpi ne, %14, %c0_i32_7 : i32
    scf.if %15 {
      %cst_11 = arith.constant dense<0xFF800000> : vector<16xf32>
      %21 = vector.multi_reduction <maximumf>, %5, %cst_11 [1] : vector<16x16xf32> to vector<16xf32>
      %22 = vector.shape_cast %21 : vector<16xf32> to vector<16x1xf32>
      %c0_12 = arith.constant 0 : index
      %c0_13 = arith.constant 0 : index
      %23 = vector.load %arg5[%c0_12, %c0_13] : memref<16x1xf32, #tpu.memory_space<vmem>>, vector<16x1xf32>
      %24 = arith.maximumf %23, %22 : vector<16x1xf32>
      %25 = vector.broadcast %24 : vector<16x1xf32> to vector<16x16xf32>
      %26 = arith.subf %5, %25 : vector<16x16xf32>
      %27 = math.exp %26 : vector<16x16xf32>
      %cst_14 = arith.constant dense<0.000000e+00> : vector<16xf32>
      %28 = vector.multi_reduction <add>, %27, %cst_14 [1] : vector<16x16xf32> to vector<16xf32>
      %29 = vector.shape_cast %28 : vector<16xf32> to vector<16x1xf32>
      %c0_15 = arith.constant 0 : index
      %c0_16 = arith.constant 0 : index
      %30 = vector.load %arg5[%c0_15, %c0_16] : memref<16x1xf32, #tpu.memory_space<vmem>>, vector<16x1xf32>
      %31 = arith.subf %30, %24 : vector<16x1xf32>
      %32 = math.exp %31 : vector<16x1xf32>
      %c0_17 = arith.constant 0 : index
      %c0_18 = arith.constant 0 : index
      %33 = vector.load %arg6[%c0_17, %c0_18] : memref<16x1xf32, #tpu.memory_space<vmem>>, vector<16x1xf32>
      %34 = arith.mulf %32, %33 : vector<16x1xf32>
      %35 = arith.addf %34, %29 : vector<16x1xf32>
      %c0_19 = arith.constant 0 : index
      %c0_20 = arith.constant 0 : index
      %36 = vector.load %arg6[%c0_19, %c0_20] : memref<16x1xf32, #tpu.memory_space<vmem>>, vector<16x1xf32>
      tpu.vector_store %arg6[%c0_19, %c0_20], %35 {strides = array<i32>} : memref<16x1xf32, #tpu.memory_space<vmem>>, vector<16x1xf32>,
      %c0_21 = arith.constant 0 : index
      %c0_22 = arith.constant 0 : index
      %37 = vector.load %arg5[%c0_21, %c0_22] : memref<16x1xf32, #tpu.memory_space<vmem>>, vector<16x1xf32>
      tpu.vector_store %arg5[%c0_21, %c0_22], %24 {strides = array<i32>} : memref<16x1xf32, #tpu.memory_space<vmem>>, vector<16x1xf32>,
    } else {
    }
    %16 = arith.extui %12 : i1 to i32
    %c0_i32_8 = arith.constant 0 : i32
    %17 = arith.cmpi ne, %16, %c0_i32_8 : i32
    scf.if %17 {
      %21 = tpu.iota {dimensions = array<i32: 0>} : vector<16x16xi32>
      %22 = vector.broadcast %6 : i32 to vector<16x16xi32>
      %23 = arith.addi %22, %21 : vector<16x16xi32>
      %24 = tpu.iota {dimensions = array<i32: 1>} : vector<16x16xi32>
      %25 = vector.broadcast %7 : i32 to vector<16x16xi32>
      %26 = arith.addi %25, %24 : vector<16x16xi32>
      %27 = arith.cmpi ne, %23, %26 : vector<16x16xi32>
      %cst_11 = arith.constant dense<0xFF800000> : vector<16xf32>
      %28 = vector.multi_reduction <maximumf>, %5, %cst_11 [1] : vector<16x16xf32> to vector<16xf32>
      %29 = vector.shape_cast %28 : vector<16xf32> to vector<16x1xf32>
      %c0_12 = arith.constant 0 : index
      %c0_13 = arith.constant 0 : index
      %30 = vector.load %arg5[%c0_12, %c0_13] : memref<16x1xf32, #tpu.memory_space<vmem>>, vector<16x1xf32>
      %31 = arith.maximumf %30, %29 : vector<16x1xf32>
      %cst_14 = arith.constant 0xFF800000 : f32
      %32 = vector.broadcast %cst_14 : f32 to vector<16x16xf32>
      %33 = arith.select %27, %5, %32 : vector<16x16xi1>, vector<16x16xf32>
      %34 = vector.broadcast %31 : vector<16x1xf32> to vector<16x16xf32>
      %35 = arith.subf %33, %34 : vector<16x16xf32>
      %36 = math.exp %35 : vector<16x16xf32>
      %c0_15 = arith.constant 0 : index
      %c0_16 = arith.constant 0 : index
      %37 = vector.load %arg5[%c0_15, %c0_16] : memref<16x1xf32, #tpu.memory_space<vmem>>, vector<16x1xf32>
      %38 = arith.subf %37, %31 : vector<16x1xf32>
      %39 = math.exp %38 : vector<16x1xf32>
      %c0_17 = arith.constant 0 : index
      %c0_18 = arith.constant 0 : index
      %40 = vector.load %arg6[%c0_17, %c0_18] : memref<16x1xf32, #tpu.memory_space<vmem>>, vector<16x1xf32>
      %41 = arith.mulf %39, %40 : vector<16x1xf32>
      %cst_19 = arith.constant dense<0.000000e+00> : vector<16xf32>
      %42 = vector.multi_reduction <add>, %36, %cst_19 [1] : vector<16x16xf32> to vector<16xf32>
      %43 = vector.shape_cast %42 : vector<16xf32> to vector<16x1xf32>
      %44 = arith.addf %41, %43 : vector<16x1xf32>
      %c0_20 = arith.constant 0 : index
      %c0_21 = arith.constant 0 : index
      %45 = vector.load %arg6[%c0_20, %c0_21] : memref<16x1xf32, #tpu.memory_space<vmem>>, vector<16x1xf32>
      tpu.vector_store %arg6[%c0_20, %c0_21], %44 {strides = array<i32>} : memref<16x1xf32, #tpu.memory_space<vmem>>, vector<16x1xf32>,
      %c0_22 = arith.constant 0 : index
      %c0_23 = arith.constant 0 : index
      %46 = vector.load %arg5[%c0_22, %c0_23] : memref<16x1xf32, #tpu.memory_space<vmem>>, vector<16x1xf32>
      tpu.vector_store %arg5[%c0_22, %c0_23], %31 {strides = array<i32>} : memref<16x1xf32, #tpu.memory_space<vmem>>, vector<16x1xf32>,
    } else {
    }
    %c0_i32_9 = arith.constant 0 : i32
    %18 = arith.cmpi eq, %arg1, %c0_i32_9 : i32
    %19 = arith.extui %18 : i1 to i32
    %c0_i32_10 = arith.constant 0 : i32
    %20 = arith.cmpi ne, %19, %c0_i32_10 : i32
    scf.if %20 {
      %c0_11 = arith.constant 0 : index
      %c0_12 = arith.constant 0 : index
      %21 = vector.load %arg5[%c0_11, %c0_12] : memref<16x1xf32, #tpu.memory_space<vmem>>, vector<16x1xf32>
      %c0_13 = arith.constant 0 : index
      %c0_14 = arith.constant 0 : index
      %22 = vector.load %arg6[%c0_13, %c0_14] : memref<16x1xf32, #tpu.memory_space<vmem>>, vector<16x1xf32>
      %cst_15 = arith.constant 9.99999993E-9 : f32
      %23 = vector.broadcast %cst_15 : f32 to vector<16x1xf32>
      %24 = arith.addf %22, %23 : vector<16x1xf32>
      %25 = math.log %24 : vector<16x1xf32>
      %26 = arith.addf %21, %25 : vector<16x1xf32>
      %27 = vector.shape_cast %26 : vector<16x1xf32> to vector<16x1xf32>
      %28 = vector.broadcast %27 : vector<16x1xf32> to vector<16x128xf32>
      %c0_16 = arith.constant 0 : index
      %c0_17 = arith.constant 0 : index
      %29 = vector.load %arg4[%c0_16, %c0_17] : memref<16x128xf32, #tpu.memory_space<vmem>>, vector<16x128xf32>
      tpu.vector_store %arg4[%c0_16, %c0_17], %28 {strides = array<i32>} : memref<16x128xf32, #tpu.memory_space<vmem>>, vector<16x128xf32>,
    } else {
    }
    return
  }
  func.func @transform_0(%arg0: i32, %arg1: i32) -> (i32, i32) {
    %c0_i32 = arith.constant 0 : i32
    %c0_i32_0 = arith.constant 0 : i32
    return %arg0, %c0_i32 : i32, i32
  }
  func.func @transform_1(%arg0: i32, %arg1: i32) -> (i32, i32) {
    %c0_i32 = arith.constant 0 : i32
    %c0_i32_0 = arith.constant 0 : i32
    return %arg1, %c0_i32 : i32, i32
  }
  func.func @transform_2(%arg0: i32, %arg1: i32) -> (i32, i32) {
    %c0_i32 = arith.constant 0 : i32
    %c0_i32_0 = arith.constant 0 : i32
    return %arg0, %c0_i32 : i32, i32
  }
}

</mosaic_0001>

<llo_original>
// kernel: tpu_custom_call.1
$region0: #{tpu_custom_call.1}
  #allocation0 [shape = 'u32[]', space=smem, size = 0x4, offset = 0x4, fixed_abs, tag = 'smem constant byte address 0x4 - core index']
  #allocation1 [shape = 'u32[144,128]{1,0:T(1,128)}', space=vmem, size = 0x12000, scoped, tag = 'internal scratch']
  #allocation2 [shape = 'f32[16,1]{1,0:T(8,128)}', space=vmem, size = 0x2000, scoped, tag = 'scratch operand']
  #allocation3 [shape = 'f32[16,1]{1,0:T(8,128)}', space=vmem, size = 0x2000, scoped, tag = 'scratch operand']
  %s0 = inlined_call_operand.hbm [shape: f32[16,128], index: 0, kind: input, shape index: {}]
  %s1 = inlined_call_operand.hbm [shape: f32[16,128], index: 1, kind: input, shape index: {}]
  %s2 = inlined_call_operand.hbm [shape: f32[16,128], index: 2, kind: output, shape index: {}]
  %s3 = sld [smem:[#allocation0]]
  $region42: #{tpu_custom_call.1} parent=0
    _
  %s5 = ssub.s32 1, %s3
  %s6 = scalar_select 0, %s5, %s3
  $region1: #{tpu_custom_call.1} parent=0
    #allocation4 [shape = 'u8[8192]{0}', space=vmem, size = 0x2000, scoped, tag = 'input window, operand 0, single buffered']
    #allocation5 [shape = 's32[1]{0}', space=sflag, size = 0x4, scoped, tag = 'scoped memory for tpu_custom_call.1']
    #allocation6 [shape = 's32[1]{0}', space=sflag, size = 0x4, scoped, tag = 'scoped memory for tpu_custom_call.1']
    #allocation7 [shape = 'u8[8192]{0}', space=vmem, size = 0x2000, scoped, tag = 'input window, operand 1, single buffered']
    #allocation8 [shape = 's32[1]{0}', space=sflag, size = 0x4, scoped, tag = 'scoped memory for tpu_custom_call.1']
    #allocation9 [shape = 'u8[8192]{0}', space=vmem, size = 0x2000, scoped, tag = 'output window, operand 0, single buffered']
    %7 = vsyncpa [#allocation5], 0
    %8 = vsyncpa [#allocation8], 0
    %9 = vsyncpa [#allocation6], 0
    // Predicated region
    $region2: #{tpu_custom_call.1} parent=1 // pred_check
      _
    $region3: #{tpu_custom_call.1} parent=1 // pred_check_branch
      %11 = sbr.rel (0) target = $region5
    $region4: #{tpu_custom_call.1} parent=1 // pred_region
      %s13 = ssub.s32 256, 256
      %14 = vsyncadd [#allocation5], %s13
      %s15 = sshll.u32 [#allocation4], 4
      %s16 = int_to_ptr.vmem [resolvable:$true] %s15
      %21 = dma.hbm_to_vmem [thread:$0]  %s0, 256, %s16, [#allocation5], 128, 128, 8
    $region5: #{tpu_custom_call.1} parent=1 // pred_fallthru
      _
    // Predicated region
    $region6: #{tpu_custom_call.1} parent=1 // pred_check
      _
    $region7: #{tpu_custom_call.1} parent=1 // pred_check_branch
      %23 = sbr.rel (0) target = $region9
    $region8: #{tpu_custom_call.1} parent=1 // pred_region
      %s25 = ssub.s32 256, 256
      %26 = vsyncadd [#allocation8], %s25
      %s27 = sshll.u32 [#allocation7], 4
      %s28 = int_to_ptr.vmem [resolvable:$true] %s27
      %33 = dma.hbm_to_vmem [thread:$0]  %s1, 256, %s28, [#allocation8], 128, 128, 8
    $region9: #{tpu_custom_call.1} parent=1 // pred_fallthru
      _
    // Predicated region
    $region10: #{tpu_custom_call.1} parent=1 // pred_check
      _
    $region11: #{tpu_custom_call.1} parent=1 // pred_check_branch
      %35 = sbr.rel (0) target = $region13
    $region12: #{tpu_custom_call.1} parent=1 // pred_region
      %36 = dma.done [#allocation5], 256
    $region13: #{tpu_custom_call.1} parent=1 // pred_fallthru
      _
    // Predicated region
    $region14: #{tpu_custom_call.1} parent=1 // pred_check
      _
    $region15: #{tpu_custom_call.1} parent=1 // pred_check_branch
      %38 = sbr.rel (0) target = $region17
    $region16: #{tpu_custom_call.1} parent=1 // pred_region
      %39 = dma.done [#allocation8], 256
    $region17: #{tpu_custom_call.1} parent=1 // pred_fallthru
      _
    %p40 = scmp.eq.s32.totalorder 0, 0
    // Predicated region
    $region18: #{tpu_custom_call.1} parent=1 // pred_check
      %p41 = pneg %p40
    $region19: #{tpu_custom_call.1} parent=1 // pred_check_branch
      %43 = sbr.rel (%p41) target = $region21
    $region20: #{tpu_custom_call.1} parent=1 // pred_region
      %vm44 = vcmask 7168
      %45 = vst.msk [vmem:[#allocation2] sm:$0xff] %vm44, -inf
      %46 = vst.msk [vmem:[#allocation2 + $0x8] sm:$0xff] %vm44, -inf
      %47 = vst.msk [vmem:[#allocation3] sm:$0xff] %vm44, 0.0
      %48 = vst.msk [vmem:[#allocation3 + $0x8] sm:$0xff] %vm44, 0.0
    $region21: #{tpu_custom_call.1} parent=1 // pred_fallthru
      _
    %v49 = vld [vmem:[#allocation4] sm:$0xff]
    %v50 = vld [vmem:[#allocation4 + $0x8] sm:$0xff]
    %v51 = vld [vmem:[#allocation7] sm:$0xff]
    %v52 = vld [vmem:[#allocation7 + $0x8] sm:$0xff]
    %53 = vmatprep.subr.mxu0 0.0
    %54 = vmatpush1.xpose.msra.mxu0 0.0
    %55 = vmatprep.subr.mxu0 0.0
    %56 = vmatpush1.xpose.msra.mxu0 0.0
    %57 = vmatprep.subr.mxu0 0.0
    %58 = vmatpush1.xpose.msra.mxu0 0.0
    %59 = vmatprep.subr.mxu0 0.0
    %60 = vmatpush1.xpose.msra.mxu0 0.0
    %61 = vmatprep.subr.mxu0 0.0
    %62 = vmatpush1.xpose.msra.mxu0 0.0
    %63 = vmatprep.subr.mxu0 0.0
    %64 = vmatpush1.xpose.msra.mxu0 0.0
    %65 = vmatprep.subr.mxu0 0.0
    %66 = vmatpush1.xpose.msra.mxu0 0.0
    %67 = vmatprep.subr.mxu0 0.0
    %68 = vmatpush1.xpose.msra.mxu0 0.0
    %69 = vmatprep.subr.mxu0 0.0
    %70 = vmatpush1.xpose.msra.mxu0 0.0
    %71 = vmatprep.subr.mxu0 0.0
    %72 = vmatpush1.xpose.msra.mxu0 0.0
    %73 = vmatprep.subr.mxu0 0.0
    %74 = vmatpush1.xpose.msra.mxu0 0.0
    %75 = vmatprep.subr.mxu0 0.0
    %76 = vmatpush1.xpose.msra.mxu0 0.0
    %77 = vmatprep.subr.mxu0 0.0
    %78 = vmatpush1.xpose.msra.mxu0 0.0
    %79 = vmatprep.subr.mxu0 0.0
    %80 = vmatpush1.xpose.msra.mxu0 0.0
    %81 = vmatprep.subr.mxu0 0.0
    %82 = vmatpush1.xpose.msra.mxu0 %v52
    %83 = vmatprep.subr.mxu0 0.0
    %84 = vmatpush1.xpose.msra.mxu0 %v51
    %85 = vmatprep.subr.mxu0 0.0
    %86 = vmatpush2.xpose.msra.mxu0 0.0
    %87 = vmatprep.subr.mxu0 0.0
    %88 = vmatpush2.xpose.msra.mxu0 0.0
    %89 = vmatprep.subr.mxu0 0.0
    %90 = vmatpush2.xpose.msra.mxu0 0.0
    %91 = vmatprep.subr.mxu0 0.0
    %92 = vmatpush2.xpose.msra.mxu0 0.0
    %93 = vmatprep.subr.mxu0 0.0
    %94 = vmatpush2.xpose.msra.mxu0 0.0
    %95 = vmatprep.subr.mxu0 0.0
    %96 = vmatpush2.xpose.msra.mxu0 0.0
    %97 = vmatprep.subr.mxu0 0.0
    %98 = vmatpush2.xpose.msra.mxu0 0.0
    %99 = vmatprep.subr.mxu0 0.0
    %100 = vmatpush2.xpose.msra.mxu0 0.0
    %101 = vmatprep.subr.mxu0 0.0
    %102 = vmatpush2.xpose.msra.mxu0 0.0
    %103 = vmatprep.subr.mxu0 0.0
    %104 = vmatpush2.xpose.msra.mxu0 0.0
    %105 = vmatprep.subr.mxu0 0.0
    %106 = vmatpush2.xpose.msra.mxu0 0.0
    %107 = vmatprep.subr.mxu0 0.0
    %108 = vmatpush2.xpose.msra.mxu0 0.0
    %109 = vmatprep.subr.mxu0 0.0
    %110 = vmatpush2.xpose.msra.mxu0 0.0
    %111 = vmatprep.subr.mxu0 0.0
    %112 = vmatpush2.xpose.msra.mxu0 0.0
    %113 = vmatprep.subr.mxu0 0.0
    %114 = vmatpush2.xpose.msra.mxu0 0.0
    %115 = vmatprep.subr.mxu0 0.0
    %116 = vmatpush2.xpose.msra.mxu0 0.0
    %117 = vmatprep.mubr.f32.mxu0 0.0
    %118 = vmatmul.mubr.f32.gmra.mxu0 %v49
    %v119 = vpop.f32.mrf.mxu0
    %v120 = vadd.f32 0.0, %v119
    %v121 = vpop.f32.mrf.mxu0
    %122 = vmatprep.mubr.f32.mxu0 0.0
    %123 = vmatmul.mubr.f32.gmra.mxu0 %v50
    %v124 = vpop.f32.mrf.mxu0
    %v125 = vadd.f32 0.0, %v124
    %v126 = vpop.f32.mrf.mxu0
    %127 = vdwg.mxu0
    %s128 = smul.u32 0, 16
    %s129 = smul.u32 0, 16
    %s130 = sadd.s32 %s129, 16
    %p131 = scmp.lt.s32.totalorder %s128, %s130
    %s132 = sadd.s32 %s128, 16
    %p133 = scmp.lt.s32.totalorder %s129, %s132
    %p134 = pnand %p131, %p133
    %p135 = pneg %p134
    // Predicated region
    $region22: #{tpu_custom_call.1} parent=1 // pred_check
      _
    $region23: #{tpu_custom_call.1} parent=1 // pred_check_branch
      %137 = sbr.rel (%p134) target = $region25
    $region24: #{tpu_custom_call.1} parent=1 // pred_region
      %v138 = vlaneseq
      %v139 = vshrl.u32 %v138, 7
      %v140 = vadd.s32 %v139, 8
      %v141 = vstv %s128
      %v142 = vadd.s32 %v141, %v139
      %v143 = vadd.s32 %v141, %v140
      %v144 = vlaneseq
      %v145 = vand.u32 %v144, 127
      %v146 = vstv %s129
      %v147 = vadd.s32 %v146, %v145
      %vm148 = vcmp.ne.s32.totalorder %v142, %v147
      %vm149 = vcmp.ne.s32.totalorder %v143, %v147
      %vm150 = vcmask 130048
      %v151 = vsel %vm150, %v120, -inf
      %152 = vmax.xlane.f32.xlu0 %v151
      %v153 = vpop.xlane.xlu0 %152
      %v154 = vsel %vm150, %v125, -inf
      %155 = vmax.xlane.f32.xlu0 %v154
      %v156 = vpop.xlane.xlu0 %155
      %v157 = vld [vmem:[#allocation2] sm:$0xff]
      %v158 = vld [vmem:[#allocation2 + $0x8] sm:$0xff]
      %v159 = vmax.f32 %v157, %v153
      %v160 = vmax.f32 %v158, %v156
      %v161 = vsel %vm148, %v120, -inf
      %v162 = vsel %vm149, %v125, -inf
      %164 = vset.pattern.permute.xlu0 0
      %165 = vperm.xlu0 %164, %v159
      %v166 = vpop.permute.xlu0 %165
      %169 = vset.pattern.permute.xlu0 0
      %170 = vperm.xlu0 %169, %v160
      %v171 = vpop.permute.xlu0 %170
      %v173 = vsub.f32 %v161, %v166
      %v174 = vsub.f32 %v162, %v171
      %v175 = vmul.f32 %v173, 1.442695
      %v176 = vpow.pop %v175
      %v177 = vmul.f32 %v174, 1.442695
      %v178 = vpow.pop %v177
      %v179 = vsub.f32 %v157, %v159
      %v180 = vsub.f32 %v158, %v160
      %v181 = vmul.f32 %v179, 1.442695
      %v182 = vpow.pop %v181
      %v183 = vmul.f32 %v180, 1.442695
      %v184 = vpow.pop %v183
      %v185 = vld [vmem:[#allocation3] sm:$0xff]
      %v186 = vld [vmem:[#allocation3 + $0x8] sm:$0xff]
      %v187 = vmul.f32 %v182, %v185
      %v188 = vmul.f32 %v184, %v186
      %v189 = vsel %vm150, %v176, 0.0
      %190 = vadd.xlane.f32.xlu0 %v189
      %v191 = vpop.xlane.xlu0 %190
      %v192 = vsel %vm150, %v178, 0.0
      %193 = vadd.xlane.f32.xlu0 %v192
      %v194 = vpop.xlane.xlu0 %193
      %v195 = vadd.f32 %v187, %v191
      %v196 = vadd.f32 %v188, %v194
      %vm197 = vcmask 7168
      %198 = vst.msk [vmem:[#allocation3] sm:$0xff] %vm197, %v195
      %199 = vst.msk [vmem:[#allocation3 + $0x8] sm:$0xff] %vm197, %v196
      %200 = vst.msk [vmem:[#allocation2] sm:$0xff] %vm197, %v159
      %201 = vst.msk [vmem:[#allocation2 + $0x8] sm:$0xff] %vm197, %v160
    $region25: #{tpu_custom_call.1} parent=1 // pred_fallthru
      _
    // Predicated region
    $region26: #{tpu_custom_call.1} parent=1 // pred_check
      %p202 = pneg %p134
    $region27: #{tpu_custom_call.1} parent=1 // pred_check_branch
      %204 = sbr.rel (%p202) target = $region29
    $region28: #{tpu_custom_call.1} parent=1 // pred_region
      %vm205 = vcmask 130048
      %v206 = vsel %vm205, %v120, -inf
      %207 = vmax.xlane.f32.xlu0 %v206
      %v208 = vpop.xlane.xlu0 %207
      %v209 = vsel %vm205, %v125, -inf
      %210 = vmax.xlane.f32.xlu0 %v209
      %v211 = vpop.xlane.xlu0 %210
      %v212 = vld [vmem:[#allocation2] sm:$0xff]
      %v213 = vld [vmem:[#allocation2 + $0x8] sm:$0xff]
      %v214 = vmax.f32 %v212, %v208
      %v215 = vmax.f32 %v213, %v211
      %217 = vset.pattern.permute.xlu0 0
      %218 = vperm.xlu0 %217, %v214
      %v219 = vpop.permute.xlu0 %218
      %222 = vset.pattern.permute.xlu0 0
      %223 = vperm.xlu0 %222, %v215
      %v224 = vpop.permute.xlu0 %223
      %v226 = vsub.f32 %v120, %v219
      %v227 = vsub.f32 %v125, %v224
      %v228 = vmul.f32 %v226, 1.442695
      %v229 = vpow.pop %v228
      %v230 = vmul.f32 %v227, 1.442695
      %v231 = vpow.pop %v230
      %v232 = vsel %vm205, %v229, 0.0
      %233 = vadd.xlane.f32.xlu0 %v232
      %v234 = vpop.xlane.xlu0 %233
      %v235 = vsel %vm205, %v231, 0.0
      %236 = vadd.xlane.f32.xlu0 %v235
      %v237 = vpop.xlane.xlu0 %236
      %v238 = vsub.f32 %v212, %v214
      %v239 = vsub.f32 %v213, %v215
      %v240 = vmul.f32 %v238, 1.442695
      %v241 = vpow.pop %v240
      %v242 = vmul.f32 %v239, 1.442695
      %v243 = vpow.pop %v242
      %v244 = vld [vmem:[#allocation3] sm:$0xff]
      %v245 = vld [vmem:[#allocation3 + $0x8] sm:$0xff]
      %v246 = vmul.f32 %v241, %v244
      %v247 = vmul.f32 %v243, %v245
      %v248 = vadd.f32 %v246, %v234
      %v249 = vadd.f32 %v247, %v237
      %vm250 = vcmask 7168
      %251 = vst.msk [vmem:[#allocation3] sm:$0xff] %vm250, %v248
      %252 = vst.msk [vmem:[#allocation3 + $0x8] sm:$0xff] %vm250, %v249
      %253 = vst.msk [vmem:[#allocation2] sm:$0xff] %vm250, %v214
      %254 = vst.msk [vmem:[#allocation2 + $0x8] sm:$0xff] %vm250, %v215
    $region29: #{tpu_custom_call.1} parent=1 // pred_fallthru
      _
    // Predicated region
    $region30: #{tpu_custom_call.1} parent=1 // pred_check
      %p255 = pneg %p40
    $region31: #{tpu_custom_call.1} parent=1 // pred_check_branch
      %257 = sbr.rel (%p255) target = $region33
    $region32: #{tpu_custom_call.1} parent=1 // pred_region
      %v258 = vld [vmem:[#allocation2] sm:$0xff]
      %v259 = vld [vmem:[#allocation2 + $0x8] sm:$0xff]
      %v260 = vld [vmem:[#allocation3] sm:$0xff]
      %v261 = vld [vmem:[#allocation3 + $0x8] sm:$0xff]
      %v262 = vadd.f32 %v260, 1e-08
      %v263 = vadd.f32 %v261, 1e-08
      %v264 = vlog2.pop %v262
      %v265 = vmul.f32 %v264, 0.6931472
      %v266 = vlog2.pop %v263
      %v267 = vmul.f32 %v266, 0.6931472
      %v268 = vadd.f32 %v258, %v265
      %v269 = vadd.f32 %v259, %v267
      %271 = vset.pattern.permute.xlu0 0
      %272 = vperm.xlu0 %271, %v268
      %v273 = vpop.permute.xlu0 %272
      %276 = vset.pattern.permute.xlu0 0
      %277 = vperm.xlu0 %276, %v269
      %v278 = vpop.permute.xlu0 %277
      %280 = vst [vmem:[#allocation9] sm:$0xff] %v273
      %281 = vst [vmem:[#allocation9 + $0x8] sm:$0xff] %v278
    $region33: #{tpu_custom_call.1} parent=1 // pred_fallthru
      _
    // Predicated region
    $region34: #{tpu_custom_call.1} parent=1 // pred_check
      _
    $region35: #{tpu_custom_call.1} parent=1 // pred_check_branch
      %283 = sbr.rel (0) target = $region37
    $region36: #{tpu_custom_call.1} parent=1 // pred_region
      %s285 = ssub.s32 256, 256
      %286 = vsyncadd [#allocation6], %s285
      %s287 = sshll.u32 [#allocation9], 4
      %s288 = int_to_ptr.vmem [resolvable:$true] %s287
      %293 = dma.vmem_to_hbm [thread:$0]  %s288, 256, %s2, [#allocation6], 128, 128, 8
    $region37: #{tpu_custom_call.1} parent=1 // pred_fallthru
      _
    // Predicated region
    $region38: #{tpu_custom_call.1} parent=1 // pred_check
      _
    $region39: #{tpu_custom_call.1} parent=1 // pred_check_branch
      %295 = sbr.rel (0) target = $region41
    $region40: #{tpu_custom_call.1} parent=1 // pred_region
      %296 = dma.done [#allocation6], 256
    $region41: #{tpu_custom_call.1} parent=1 // pred_fallthru
      _
    %297 = vsyncpa [#allocation5], 1
    %298 = vsyncpa [#allocation8], 1
    %299 = vsyncpa [#allocation6], 1

</llo_original>
